<compile_context>
chip_gen: v5e
topology: v5e:2x2
jax: 0.10.0
libtpu: 0.0.40
codegen_flags: <defaults>
</compile_context>

<pallas_src>
import jax
import jax.numpy as jnp
from jax import lax
from jax.experimental import pallas as pl
from jax.experimental.pallas import tpu as pltpu

NUM_HEADS = 8      # stored but unused by the reference forward (single-head math)
D_MODEL = 64
D_OUT = 2
OUT_LANES = 128    # lane-dense padded output width


def _flash_attn_head_kernel(xq_ref, xkv_ref, wq_ref, bq_ref, wkv_ref, bkv_ref,
                            wo_ref, bo_ref, out_ref,
                            q_sc, m_sc, l_sc, acc_sc):
    ki = pl.program_id(1)

    @pl.when(ki == 0)
    def _init():
        xq = xq_ref[...].astype(jnp.float32)
        q = jnp.dot(xq, wq_ref[...].astype(jnp.float32),
                    preferred_element_type=jnp.float32)
        q = q + bq_ref[...].astype(jnp.float32)
        q_sc[...] = q.astype(jnp.bfloat16)
        m_sc[...] = jnp.full(m_sc.shape, -jnp.inf, dtype=m_sc.dtype)
        l_sc[...] = jnp.zeros(l_sc.shape, dtype=l_sc.dtype)
        acc_sc[...] = jnp.zeros(acc_sc.shape, dtype=acc_sc.dtype)

    # Fused K|V projection for this kv tile: one 128-lane-wide matmul.
    xkv = xkv_ref[...].astype(jnp.float32)
    kv = jnp.dot(xkv, wkv_ref[...].astype(jnp.float32),
                 preferred_element_type=jnp.float32)
    kv = kv + bkv_ref[...].astype(jnp.float32)
    k = kv[:, :D_MODEL].astype(jnp.bfloat16)
    v = kv[:, D_MODEL:].astype(jnp.bfloat16)

    # Fold the (64 -> 2) head into the kv loop:  vo = v @ Wo_pad   (tkv, 128)
    vo = jnp.dot(v, wo_ref[...].astype(jnp.bfloat16),
                 preferred_element_type=jnp.float32).astype(jnp.bfloat16)

    # logits = q @ k^T  (contract last dims of both -> no explicit transpose).
    # No 1/sqrt(d) scaling: faithful to the reference module.
    s = lax.dot_general(q_sc[...], k,
                        dimension_numbers=(((1,), (1,)), ((), ())),
                        preferred_element_type=jnp.float32)

    # Online softmax (fp32 bookkeeping).
    m_prev = m_sc[...]
    m_new = jnp.maximum(m_prev, jnp.max(s, axis=-1, keepdims=True))
    alpha = jnp.exp(m_prev - m_new)
    p = jnp.exp(s - m_new)
    l_sc[...] = alpha * l_sc[...] + jnp.sum(p, axis=-1, keepdims=True)
    acc_sc[...] = alpha * acc_sc[...] + jnp.dot(p.astype(jnp.bfloat16), vo,
                                                preferred_element_type=jnp.float32)
    m_sc[...] = m_new

    @pl.when(ki == pl.num_programs(1) - 1)
    def _finalize():
        # Dropout(p=0.5) on attn is identity in eval mode.
        inv = pl.reciprocal(l_sc[...], approx=True)
        y = acc_sc[...] * inv + bo_ref[...].astype(jnp.float32)
        out_ref[...] = y.astype(out_ref.dtype)


def _pick_tile(n, target):
    """Largest tile <= target that divides n and is sublane-friendly."""
    t = min(target, n)
    if n % t == 0:
        return t
    for cand in range(t, 0, -1):
        if n % cand == 0 and (cand % 8 == 0 or cand == n):
            return cand
    return n


def model_forward(x1, params):
    """x1: arbitrary-rank array with last dim == D_MODEL."""
    x = x1.reshape(-1, x1.shape[-1])            # (N, d_model)
    n, d = x.shape
    assert d == D_MODEL

    wq, bq, wk, bk, wv, bv, wo, bo = params

    # Linear weights (out, in) -> (in, out); K and V weights fused side-by-side.
    wq_t = wq.T                                           # (64, 64)
    wkv_t = jnp.concatenate([wk.T, wv.T], axis=1)         # (64, 128)
    bq2 = bq.reshape(1, -1)                               # (1, 64)
    bkv2 = jnp.concatenate([bk, bv]).reshape(1, -1)       # (1, 128)

    # Lane-pad the 2-wide head to 128 lanes so kernel stores are lane-dense.
    wo_pad = jnp.zeros((D_MODEL, OUT_LANES), wo.dtype).at[:, :D_OUT].set(wo.T)
    bo_pad = jnp.zeros((1, OUT_LANES), bo.dtype).at[0, :D_OUT].set(bo)

    tq = _pick_tile(n, 256)
    tkv = _pick_tile(n, 256)
    nq, nk = n // tq, n // tkv

    grid_spec = pltpu.PrefetchScalarGridSpec(
        num_scalar_prefetch=0,
        grid=(nq, nk),
        in_specs=[
            pl.BlockSpec((tq, D_MODEL), lambda qi, ki: (qi, 0)),        # x (query rows)
            pl.BlockSpec((tkv, D_MODEL), lambda qi, ki: (ki, 0)),       # x (kv rows)
            pl.BlockSpec((D_MODEL, D_MODEL), lambda qi, ki: (0, 0)),    # Wq^T
            pl.BlockSpec((1, D_MODEL), lambda qi, ki: (0, 0)),          # bq
            pl.BlockSpec((D_MODEL, 2 * D_MODEL), lambda qi, ki: (0, 0)),  # [Wk^T | Wv^T]
            pl.BlockSpec((1, 2 * D_MODEL), lambda qi, ki: (0, 0)),      # [bk | bv]
            pl.BlockSpec((D_MODEL, OUT_LANES), lambda qi, ki: (0, 0)),  # Wo^T padded
            pl.BlockSpec((1, OUT_LANES), lambda qi, ki: (0, 0)),        # bo padded
        ],
        out_specs=pl.BlockSpec((tq, OUT_LANES), lambda qi, ki: (qi, 0)),
        scratch_shapes=[
            pltpu.VMEM((tq, D_MODEL), jnp.bfloat16),   # q tile (bf16 MXU operand)
            pltpu.VMEM((tq, 1), jnp.float32),          # running max m
            pltpu.VMEM((tq, 1), jnp.float32),          # running sum l
            pltpu.VMEM((tq, OUT_LANES), jnp.float32),  # output accumulator
        ],
    )

    out_padded = pl.pallas_call(
        _flash_attn_head_kernel,
        grid_spec=grid_spec,
        out_shape=jax.ShapeDtypeStruct((n, OUT_LANES), x.dtype),
        compiler_params=pltpu.CompilerParams(
            dimension_semantics=("parallel", "arbitrary")),
    )(x, x, wq_t, bq2, wkv_t, bkv2, wo_pad, bo_pad)

    return out_padded[:, :D_OUT]


def init_params(key):
    ks = jax.random.split(key, 8)
    scale = 0.05
    wq = scale * jax.random.normal(ks[0], (D_MODEL, D_MODEL), jnp.float32)
    bq = scale * jax.random.normal(ks[1], (D_MODEL,), jnp.float32)
    wk = scale * jax.random.normal(ks[2], (D_MODEL, D_MODEL), jnp.float32)
    bk = scale * jax.random.normal(ks[3], (D_MODEL,), jnp.float32)
    wv = scale * jax.random.normal(ks[4], (D_MODEL, D_MODEL), jnp.float32)
    bv = scale * jax.random.normal(ks[5], (D_MODEL,), jnp.float32)
    wo = scale * jax.random.normal(ks[6], (D_OUT, D_MODEL), jnp.float32)
    bo = scale * jax.random.normal(ks[7], (D_OUT,), jnp.float32)
    return (wq, bq, wk, bk, wv, bv, wo, bo)


def _reference(x1, params):
    # Pure-JAX fp32 reference of the same math.
    x = x1.reshape(-1, x1.shape[-1])
    wq, bq, wk, bk, wv, bv, wo, bo = params
    q = x @ wq.T + bq
    k = x @ wk.T + bk
    v = x @ wv.T + bv
    attn = jax.nn.softmax(q @ k.T, axis=-1)
    ctx = attn @ v
    return ctx @ wo.T + bo


if __name__ == "__main__":
    key = jax.random.PRNGKey(0)
    k_param, k_x = jax.random.split(key)
    params = init_params(k_param)

    # Small input: (batch=2, seq=16, d_model=64) -> flattened to (32, 64).
    x1 = jax.random.normal(k_x, (2, 16, D_MODEL), jnp.float32)

    out = model_forward(x1, params)
    out = jax.block_until_ready(out)

    ref = _reference(x1, params)
    assert out.shape == (32, D_OUT)
    # bf16 MXU operands + approx reciprocal -> slightly looser tolerance.
    assert jnp.allclose(out, ref, atol=2e-2, rtol=2e-2)

    print("KERNEL_OK")
</pallas_src>

<mosaic_0001>
module attributes {stable_mosaic.version = 11 : i64} {
  func.func @_flash_attn_head_kernel(%arg0: i32, %arg1: i32, %arg2: memref<32x64xf32, #tpu.memory_space<vmem>>, %arg3: memref<32x64xf32, #tpu.memory_space<vmem>>, %arg4: memref<64x64xf32, #tpu.memory_space<vmem>>, %arg5: memref<1x64xf32, #tpu.memory_space<vmem>>, %arg6: memref<64x128xf32, #tpu.memory_space<vmem>>, %arg7: memref<1x128xf32, #tpu.memory_space<vmem>>, %arg8: memref<64x128xf32, #tpu.memory_space<vmem>>, %arg9: memref<1x128xf32, #tpu.memory_space<vmem>>, %arg10: memref<32x128xf32, #tpu.memory_space<vmem>>, %arg11: memref<32x64xbf16, #tpu.memory_space<vmem>>, %arg12: memref<32x1xf32, #tpu.memory_space<vmem>>, %arg13: memref<32x1xf32, #tpu.memory_space<vmem>>, %arg14: memref<32x128xf32, #tpu.memory_space<vmem>>) attributes {dimension_semantics = [#tpu.dimension_semantics<parallel>, #tpu.dimension_semantics<arbitrary>], iteration_bounds = array<i64: 1, 1>, scalar_prefetch = 0 : i64, scratch_operands = 4 : i64, tpu.core_type = #tpu.core_type<tc>, window_params = [{transform_indices = @transform_0, window_bounds = array<i64: 32, 64>}, {transform_indices = @transform_1, window_bounds = array<i64: 32, 64>}, {pipeline_mode = #tpu.pipeline_mode<synchronous>, transform_indices = @transform_2, window_bounds = array<i64: 64, 64>}, {pipeline_mode = #tpu.pipeline_mode<synchronous>, transform_indices = @transform_3, window_bounds = array<i64: 1, 64>}, {pipeline_mode = #tpu.pipeline_mode<synchronous>, transform_indices = @transform_4, window_bounds = array<i64: 64, 128>}, {pipeline_mode = #tpu.pipeline_mode<synchronous>, transform_indices = @transform_5, window_bounds = array<i64: 1, 128>}, {pipeline_mode = #tpu.pipeline_mode<synchronous>, transform_indices = @transform_6, window_bounds = array<i64: 64, 128>}, {pipeline_mode = #tpu.pipeline_mode<synchronous>, transform_indices = @transform_7, window_bounds = array<i64: 1, 128>}, {transform_indices = @transform_8, window_bounds = array<i64: 32, 128>}]} {
    %c0_i32 = arith.constant 0 : i32
    %0 = arith.cmpi eq, %arg1, %c0_i32 : i32
    %1 = arith.extui %0 : i1 to i32
    %c0_i32_0 = arith.constant 0 : i32
    %2 = arith.cmpi ne, %1, %c0_i32_0 : i32
    scf.if %2 {
      %c0_29 = arith.constant 0 : index
      %c0_30 = arith.constant 0 : index
      %45 = vector.load %arg2[%c0_29, %c0_30] : memref<32x64xf32, #tpu.memory_space<vmem>>, vector<32x64xf32>
      %c0_31 = arith.constant 0 : index
      %c0_32 = arith.constant 0 : index
      %46 = vector.load %arg4[%c0_31, %c0_32] : memref<64x64xf32, #tpu.memory_space<vmem>>, vector<64x64xf32>
      %cst_33 = arith.constant dense<0.000000e+00> : vector<32x64xf32>
      %47 = tpu.matmul %45, %46, %cst_33 {dimension_numbers = #tpu.dot_dimension_numbers<[1], [0], [0], [1], [0, 0, 1, 1], [], []>} : vector<32x64xf32>, vector<64x64xf32>, vector<32x64xf32> -> vector<32x64xf32>
      %c0_34 = arith.constant 0 : index
      %c0_35 = arith.constant 0 : index
      %48 = vector.load %arg5[%c0_34, %c0_35] : memref<1x64xf32, #tpu.memory_space<vmem>>, vector<1x64xf32>
      %49 = vector.broadcast %48 : vector<1x64xf32> to vector<32x64xf32>
      %50 = arith.addf %47, %49 : vector<32x64xf32>
      %51 = arith.truncf %50 : vector<32x64xf32> to vector<32x64xbf16>
      %c0_36 = arith.constant 0 : index
      %c0_37 = arith.constant 0 : index
      %52 = vector.load %arg11[%c0_36, %c0_37] : memref<32x64xbf16, #tpu.memory_space<vmem>>, vector<32x64xbf16>
      tpu.vector_store %arg11[%c0_36, %c0_37], %51 {strides = array<i32>} : memref<32x64xbf16, #tpu.memory_space<vmem>>, vector<32x64xbf16>,
      %cst_38 = arith.constant 0xFF800000 : f32
      %53 = vector.broadcast %cst_38 : f32 to vector<32x1xf32>
      %c0_39 = arith.constant 0 : index
      %c0_40 = arith.constant 0 : index
      %54 = vector.load %arg12[%c0_39, %c0_40] : memref<32x1xf32, #tpu.memory_space<vmem>>, vector<32x1xf32>
      tpu.vector_store %arg12[%c0_39, %c0_40], %53 {strides = array<i32>} : memref<32x1xf32, #tpu.memory_space<vmem>>, vector<32x1xf32>,
      %cst_41 = arith.constant 0.000000e+00 : f32
      %55 = vector.broadcast %cst_41 : f32 to vector<32x1xf32>
      %c0_42 = arith.constant 0 : index
      %c0_43 = arith.constant 0 : index
      %56 = vector.load %arg13[%c0_42, %c0_43] : memref<32x1xf32, #tpu.memory_space<vmem>>, vector<32x1xf32>
      tpu.vector_store %arg13[%c0_42, %c0_43], %55 {strides = array<i32>} : memref<32x1xf32, #tpu.memory_space<vmem>>, vector<32x1xf32>,
      %cst_44 = arith.constant 0.000000e+00 : f32
      %57 = vector.broadcast %cst_44 : f32 to vector<32x128xf32>
      %c0_45 = arith.constant 0 : index
      %c0_46 = arith.constant 0 : index
      %58 = vector.load %arg14[%c0_45, %c0_46] : memref<32x128xf32, #tpu.memory_space<vmem>>, vector<32x128xf32>
      tpu.vector_store %arg14[%c0_45, %c0_46], %57 {strides = array<i32>} : memref<32x128xf32, #tpu.memory_space<vmem>>, vector<32x128xf32>,
    } else {
    }
    %c0 = arith.constant 0 : index
    %c0_1 = arith.constant 0 : index
    %3 = vector.load %arg3[%c0, %c0_1] : memref<32x64xf32, #tpu.memory_space<vmem>>, vector<32x64xf32>
    %c0_2 = arith.constant 0 : index
    %c0_3 = arith.constant 0 : index
    %4 = vector.load %arg6[%c0_2, %c0_3] : memref<64x128xf32, #tpu.memory_space<vmem>>, vector<64x128xf32>
    %cst = arith.constant dense<0.000000e+00> : vector<32x128xf32>
    %5 = tpu.matmul %3, %4, %cst {dimension_numbers = #tpu.dot_dimension_numbers<[1], [0], [0], [1], [0, 0, 1, 1], [], []>} : vector<32x64xf32>, vector<64x128xf32>, vector<32x128xf32> -> vector<32x128xf32>
    %c0_4 = arith.constant 0 : index
    %c0_5 = arith.constant 0 : index
    %6 = vector.load %arg7[%c0_4, %c0_5] : memref<1x128xf32, #tpu.memory_space<vmem>>, vector<1x128xf32>
    %7 = vector.broadcast %6 : vector<1x128xf32> to vector<32x128xf32>
    %8 = arith.addf %5, %7 : vector<32x128xf32>
    %9 = vector.extract_strided_slice %8 {offsets = [0, 0], sizes = [32, 64], strides = [1, 1]} : vector<32x128xf32> to vector<32x64xf32>
    %10 = arith.truncf %9 : vector<32x64xf32> to vector<32x64xbf16>
    %11 = vector.extract_strided_slice %8 {offsets = [0, 64], sizes = [32, 64], strides = [1, 1]} : vector<32x128xf32> to vector<32x64xf32>
    %12 = arith.truncf %11 : vector<32x64xf32> to vector<32x64xbf16>
    %c0_6 = arith.constant 0 : index
    %c0_7 = arith.constant 0 : index
    %13 = vector.load %arg8[%c0_6, %c0_7] : memref<64x128xf32, #tpu.memory_space<vmem>>, vector<64x128xf32>
    %14 = arith.truncf %13 : vector<64x128xf32> to vector<64x128xbf16>
    %cst_8 = arith.constant dense<0.000000e+00> : vector<32x128xf32>
    %15 = tpu.matmul %12, %14, %cst_8 {dimension_numbers = #tpu.dot_dimension_numbers<[1], [0], [0], [1], [0, 0, 1, 1], [], []>} : vector<32x64xbf16>, vector<64x128xbf16>, vector<32x128xf32> -> vector<32x128xf32>
    %16 = arith.truncf %15 : vector<32x128xf32> to vector<32x128xbf16>
    %c0_9 = arith.constant 0 : index
    %c0_10 = arith.constant 0 : index
    %17 = vector.load %arg11[%c0_9, %c0_10] : memref<32x64xbf16, #tpu.memory_space<vmem>>, vector<32x64xbf16>
    %cst_11 = arith.constant dense<0.000000e+00> : vector<32x32xf32>
    %18 = tpu.matmul %17, %10, %cst_11 {dimension_numbers = #tpu.dot_dimension_numbers<[1], [1], [0], [0], [0, 0, 1, 0], [], []>} : vector<32x64xbf16>, vector<32x64xbf16>, vector<32x32xf32> -> vector<32x32xf32>
    %c0_12 = arith.constant 0 : index
    %c0_13 = arith.constant 0 : index
    %19 = vector.load %arg12[%c0_12, %c0_13] : memref<32x1xf32, #tpu.memory_space<vmem>>, vector<32x1xf32>
    %cst_14 = arith.constant dense<0xFF800000> : vector<32xf32>
    %20 = vector.multi_reduction <maximumf>, %18, %cst_14 [1] : vector<32x32xf32> to vector<32xf32>
    %21 = vector.shape_cast %20 : vector<32xf32> to vector<32x1xf32>
    %22 = arith.maximumf %19, %21 : vector<32x1xf32>
    %23 = arith.subf %19, %22 : vector<32x1xf32>
    %24 = math.exp %23 : vector<32x1xf32>
    %25 = vector.broadcast %22 : vector<32x1xf32> to vector<32x32xf32>
    %26 = arith.subf %18, %25 : vector<32x32xf32>
    %27 = math.exp %26 : vector<32x32xf32>
    %c0_15 = arith.constant 0 : index
    %c0_16 = arith.constant 0 : index
    %28 = vector.load %arg13[%c0_15, %c0_16] : memref<32x1xf32, #tpu.memory_space<vmem>>, vector<32x1xf32>
    %29 = arith.mulf %24, %28 : vector<32x1xf32>
    %cst_17 = arith.constant dense<0.000000e+00> : vector<32xf32>
    %30 = vector.multi_reduction <add>, %27, %cst_17 [1] : vector<32x32xf32> to vector<32xf32>
    %31 = vector.shape_cast %30 : vector<32xf32> to vector<32x1xf32>
    %32 = arith.addf %29, %31 : vector<32x1xf32>
    %c0_18 = arith.constant 0 : index
    %c0_19 = arith.constant 0 : index
    %33 = vector.load %arg13[%c0_18, %c0_19] : memref<32x1xf32, #tpu.memory_space<vmem>>, vector<32x1xf32>
    tpu.vector_store %arg13[%c0_18, %c0_19], %32 {strides = array<i32>} : memref<32x1xf32, #tpu.memory_space<vmem>>, vector<32x1xf32>,
    %c0_20 = arith.constant 0 : index
    %c0_21 = arith.constant 0 : index
    %34 = vector.load %arg14[%c0_20, %c0_21] : memref<32x128xf32, #tpu.memory_space<vmem>>, vector<32x128xf32>
    %35 = vector.broadcast %24 : vector<32x1xf32> to vector<32x128xf32>
    %36 = arith.mulf %35, %34 : vector<32x128xf32>
    %37 = arith.truncf %27 : vector<32x32xf32> to vector<32x32xbf16>
    %cst_22 = arith.constant dense<0.000000e+00> : vector<32x128xf32>
    %38 = tpu.matmul %37, %16, %cst_22 {dimension_numbers = #tpu.dot_dimension_numbers<[1], [0], [0], [1], [0, 0, 1, 1], [], []>} : vector<32x32xbf16>, vector<32x128xbf16>, vector<32x128xf32> -> vector<32x128xf32>
    %39 = arith.addf %36, %38 : vector<32x128xf32>
    %c0_23 = arith.constant 0 : index
    %c0_24 = arith.constant 0 : index
    %40 = vector.load %arg14[%c0_23, %c0_24] : memref<32x128xf32, #tpu.memory_space<vmem>>, vector<32x128xf32>
    tpu.vector_store %arg14[%c0_23, %c0_24], %39 {strides = array<i32>} : memref<32x128xf32, #tpu.memory_space<vmem>>, vector<32x128xf32>,
    %c0_25 = arith.constant 0 : index
    %c0_26 = arith.constant 0 : index
    %41 = vector.load %arg12[%c0_25, %c0_26] : memref<32x1xf32, #tpu.memory_space<vmem>>, vector<32x1xf32>
    tpu.vector_store %arg12[%c0_25, %c0_26], %22 {strides = array<i32>} : memref<32x1xf32, #tpu.memory_space<vmem>>, vector<32x1xf32>,
    %c0_i32_27 = arith.constant 0 : i32
    %42 = arith.cmpi eq, %arg1, %c0_i32_27 : i32
    %43 = arith.extui %42 : i1 to i32
    %c0_i32_28 = arith.constant 0 : i32
    %44 = arith.cmpi ne, %43, %c0_i32_28 : i32
    scf.if %44 {
      %c0_29 = arith.constant 0 : index
      %c0_30 = arith.constant 0 : index
      %45 = vector.load %arg13[%c0_29, %c0_30] : memref<32x1xf32, #tpu.memory_space<vmem>>, vector<32x1xf32>
      %46 = tpu.reciprocal %45 {approx = true} : vector<32x1xf32> -> vector<32x1xf32>
      %c0_31 = arith.constant 0 : index
      %c0_32 = arith.constant 0 : index
      %47 = vector.load %arg14[%c0_31, %c0_32] : memref<32x128xf32, #tpu.memory_space<vmem>>, vector<32x128xf32>
      %48 = vector.broadcast %46 : vector<32x1xf32> to vector<32x128xf32>
      %49 = arith.mulf %47, %48 : vector<32x128xf32>
      %c0_33 = arith.constant 0 : index
      %c0_34 = arith.constant 0 : index
      %50 = vector.load %arg9[%c0_33, %c0_34] : memref<1x128xf32, #tpu.memory_space<vmem>>, vector<1x128xf32>
      %51 = vector.broadcast %50 : vector<1x128xf32> to vector<32x128xf32>
      %52 = arith.addf %49, %51 : vector<32x128xf32>
      %c0_35 = arith.constant 0 : index
      %c0_36 = arith.constant 0 : index
      %53 = vector.load %arg10[%c0_35, %c0_36] : memref<32x128xf32, #tpu.memory_space<vmem>>, vector<32x128xf32>
      tpu.vector_store %arg10[%c0_35, %c0_36], %52 {strides = array<i32>} : memref<32x128xf32, #tpu.memory_space<vmem>>, vector<32x128xf32>,
    } else {
    }
    return
  }
  func.func @transform_0(%arg0: i32, %arg1: i32) -> (i32, i32) {
    %c0_i32 = arith.constant 0 : i32
    %c0_i32_0 = arith.constant 0 : i32
    return %arg0, %c0_i32 : i32, i32
  }
  func.func @transform_1(%arg0: i32, %arg1: i32) -> (i32, i32) {
    %c0_i32 = arith.constant 0 : i32
    %c0_i32_0 = arith.constant 0 : i32
    return %arg1, %c0_i32 : i32, i32
  }
  func.func @transform_2(%arg0: i32, %arg1: i32) -> (i32, i32) {
    %c0_i32 = arith.constant 0 : i32
    %c0_i32_0 = arith.constant 0 : i32
    %c0_i32_1 = arith.constant 0 : i32
    return %c0_i32, %c0_i32_0 : i32, i32
  }
  func.func @transform_3(%arg0: i32, %arg1: i32) -> (i32, i32) {
    %c0_i32 = arith.constant 0 : i32
    %c0_i32_0 = arith.constant 0 : i32
    %c0_i32_1 = arith.constant 0 : i32
    return %c0_i32, %c0_i32_0 : i32, i32
  }
  func.func @transform_4(%arg0: i32, %arg1: i32) -> (i32, i32) {
    %c0_i32 = arith.constant 0 : i32
    %c0_i32_0 = arith.constant 0 : i32
    %c0_i32_1 = arith.constant 0 : i32
    return %c0_i32, %c0_i32_0 : i32, i32
  }
  func.func @transform_5(%arg0: i32, %arg1: i32) -> (i32, i32) {
    %c0_i32 = arith.constant 0 : i32
    %c0_i32_0 = arith.constant 0 : i32
    %c0_i32_1 = arith.constant 0 : i32
    return %c0_i32, %c0_i32_0 : i32, i32
  }
  func.func @transform_6(%arg0: i32, %arg1: i32) -> (i32, i32) {
    %c0_i32 = arith.constant 0 : i32
    %c0_i32_0 = arith.constant 0 : i32
    %c0_i32_1 = arith.constant 0 : i32
    return %c0_i32, %c0_i32_0 : i32, i32
  }
  func.func @transform_7(%arg0: i32, %arg1: i32) -> (i32, i32) {
    %c0_i32 = arith.constant 0 : i32
    %c0_i32_0 = arith.constant 0 : i32
    %c0_i32_1 = arith.constant 0 : i32
    return %c0_i32, %c0_i32_0 : i32, i32
  }
  func.func @transform_8(%arg0: i32, %arg1: i32) -> (i32, i32) {
    %c0_i32 = arith.constant 0 : i32
    %c0_i32_0 = arith.constant 0 : i32
    return %arg0, %c0_i32 : i32, i32
  }
}

</mosaic_0001>

<llo_original>
// kernel: tpu_custom_call.1
$region0: #{tpu_custom_call.1}
  #allocation0 [shape = 'u32[]', space=smem, size = 0x4, offset = 0x4, fixed_abs, tag = 'smem constant byte address 0x4 - core index']
  #allocation1 [shape = 'u32[72,128]{1,0:T(1,128)}', space=vmem, size = 0x9000, scoped, tag = 'internal scratch']
  #allocation2 [shape = 'bf16[32,64]{1,0:T(8,128)(2,1)}', space=vmem, size = 0x2000, scoped, tag = 'scratch operand']
  #allocation3 [shape = 'f32[32,1]{1,0:T(8,128)}', space=vmem, size = 0x4000, scoped, tag = 'scratch operand']
  #allocation4 [shape = 'f32[32,1]{1,0:T(8,128)}', space=vmem, size = 0x4000, scoped, tag = 'scratch operand']
  #allocation5 [shape = 'f32[32,128]{1,0:T(8,128)}', space=vmem, size = 0x4000, scoped, tag = 'scratch operand']
  %s0 = inlined_call_operand.hbm [shape: f32[32,64], index: 0, kind: input, shape index: {}]
  %s1 = inlined_call_operand.hbm [shape: f32[32,64], index: 1, kind: input, shape index: {}]
  %s2 = inlined_call_operand.hbm [shape: f32[64,64], index: 2, kind: input, shape index: {}]
  %s3 = inlined_call_operand.vmem [shape: f32[1,64], index: 3, kind: input, shape index: {}]
  %s4 = inlined_call_operand.hbm [shape: f32[64,128], index: 4, kind: input, shape index: {}]
  %s5 = inlined_call_operand.vmem [shape: f32[1,128], index: 5, kind: input, shape index: {}]
  %s6 = inlined_call_operand.hbm [shape: f32[64,128], index: 6, kind: input, shape index: {}]
  %s7 = inlined_call_operand.vmem [shape: f32[1,128], index: 7, kind: input, shape index: {}]
  %s8 = inlined_call_operand.hbm [shape: f32[32,128], index: 8, kind: output, shape index: {}]
  %s9 = sld [smem:[#allocation0]]
  $region70: #{tpu_custom_call.1} parent=0
    _
  %s11 = ssub.s32 1, %s9
  %s12 = scalar_select 0, %s11, %s9
  $region1: #{tpu_custom_call.1} parent=0
    #allocation6 [shape = 'u8[16384]{0}', space=vmem, size = 0x4000, scoped, tag = 'input window, operand 0, single buffered']
    #allocation7 [shape = 's32[1]{0}', space=sflag, size = 0x4, scoped, tag = 'scoped memory for tpu_custom_call.1']
    #allocation8 [shape = 's32[1]{0}', space=sflag, size = 0x4, scoped, tag = 'scoped memory for tpu_custom_call.1']
    #allocation9 [shape = 'u8[16384]{0}', space=vmem, size = 0x4000, scoped, tag = 'input window, operand 1, single buffered']
    #allocation10 [shape = 's32[1]{0}', space=sflag, size = 0x4, scoped, tag = 'scoped memory for tpu_custom_call.1']
    #allocation11 [shape = 'u8[32768]{0}', space=vmem, size = 0x8000, scoped, tag = 'input window, operand 2, single buffered']
    #allocation12 [shape = 'u8[32768]{0}', space=vmem, size = 0x8000, scoped, tag = 'input window, operand 4, single buffered']
    #allocation13 [shape = 's32[1]{0}', space=sflag, size = 0x4, scoped, tag = 'scoped memory for tpu_custom_call.1']
    #allocation14 [shape = 'u8[32768]{0}', space=vmem, size = 0x8000, scoped, tag = 'input window, operand 6, single buffered']
    #allocation15 [shape = 'u8[16384]{0}', space=vmem, size = 0x4000, scoped, tag = 'output window, operand 0, single buffered']
    %13 = vsyncpa [#allocation7], 0
    %14 = vsyncpa [#allocation10], 0
    %15 = vsyncpa [#allocation13], 0
    %16 = vsyncpa [#allocation8], 0
    // Predicated region
    $region2: #{tpu_custom_call.1} parent=1 // pred_check
      _
    $region3: #{tpu_custom_call.1} parent=1 // pred_check_branch
      %18 = sbr.rel (0) target = $region5
    $region4: #{tpu_custom_call.1} parent=1 // pred_region
      %20 = vsyncadd [#allocation7], 0
      %s21 = sshll.u32 %s0, 4
      %s22 = int_to_ptr.hbm [resolvable:$true] %s21
      %s23 = sshll.u32 [#allocation6], 4
      %s24 = int_to_ptr.vmem [resolvable:$true] %s23
      %29 = dma.hbm_to_vmem [thread:$0]  %s22, 512, %s24, [#allocation7], 128, 128, 8
    $region5: #{tpu_custom_call.1} parent=1 // pred_fallthru
      _
    // Predicated region
    $region6: #{tpu_custom_call.1} parent=1 // pred_check
      _
    $region7: #{tpu_custom_call.1} parent=1 // pred_check_branch
      %31 = sbr.rel (0) target = $region9
    $region8: #{tpu_custom_call.1} parent=1 // pred_region
      %33 = vsyncadd [#allocation10], 0
      %s34 = sshll.u32 %s1, 4
      %s35 = int_to_ptr.hbm [resolvable:$true] %s34
      %s36 = sshll.u32 [#allocation9], 4
      %s37 = int_to_ptr.vmem [resolvable:$true] %s36
      %42 = dma.hbm_to_vmem [thread:$0]  %s35, 512, %s37, [#allocation10], 128, 128, 8
    $region9: #{tpu_custom_call.1} parent=1 // pred_fallthru
      _
    // Predicated region
    $region10: #{tpu_custom_call.1} parent=1 // pred_check
      _
    $region11: #{tpu_custom_call.1} parent=1 // pred_check_branch
      %44 = sbr.rel (0) target = $region13
    $region12: #{tpu_custom_call.1} parent=1 // pred_region
      %46 = vsyncadd [#allocation10], 0
      %s47 = sshll.u32 %s2, 4
      %s48 = int_to_ptr.hbm [resolvable:$true] %s47
      %s49 = sshll.u32 [#allocation11], 4
      %s50 = int_to_ptr.vmem [resolvable:$true] %s49
      %55 = dma.hbm_to_vmem [thread:$0]  %s48, 1024, %s50, [#allocation10], 128, 128, 8
    $region13: #{tpu_custom_call.1} parent=1 // pred_fallthru
      _
    // Predicated region
    $region14: #{tpu_custom_call.1} parent=1 // pred_check
      _
    $region15: #{tpu_custom_call.1} parent=1 // pred_check_branch
      %57 = sbr.rel (0) target = $region17
    $region16: #{tpu_custom_call.1} parent=1 // pred_region
      _
    $region17: #{tpu_custom_call.1} parent=1 // pred_fallthru
      _
    // Predicated region
    $region18: #{tpu_custom_call.1} parent=1 // pred_check
      _
    $region19: #{tpu_custom_call.1} parent=1 // pred_check_branch
      %59 = sbr.rel (0) target = $region21
    $region20: #{tpu_custom_call.1} parent=1 // pred_region
      %61 = vsyncadd [#allocation13], 0
      %s62 = sshll.u32 %s4, 4
      %s63 = int_to_ptr.hbm [resolvable:$true] %s62
      %s64 = sshll.u32 [#allocation12], 4
      %s65 = int_to_ptr.vmem [resolvable:$true] %s64
      %70 = dma.hbm_to_vmem [thread:$0]  %s63, 1024, %s65, [#allocation13], 128, 128, 8
    $region21: #{tpu_custom_call.1} parent=1 // pred_fallthru
      _
    // Predicated region
    $region22: #{tpu_custom_call.1} parent=1 // pred_check
      _
    $region23: #{tpu_custom_call.1} parent=1 // pred_check_branch
      %72 = sbr.rel (0) target = $region25
    $region24: #{tpu_custom_call.1} parent=1 // pred_region
      _
    $region25: #{tpu_custom_call.1} parent=1 // pred_fallthru
      _
    // Predicated region
    $region26: #{tpu_custom_call.1} parent=1 // pred_check
      _
    $region27: #{tpu_custom_call.1} parent=1 // pred_check_branch
      %74 = sbr.rel (0) target = $region29
    $region28: #{tpu_custom_call.1} parent=1 // pred_region
      %76 = vsyncadd [#allocation13], 0
      %s77 = sshll.u32 %s6, 4
      %s78 = int_to_ptr.hbm [resolvable:$true] %s77
      %s79 = sshll.u32 [#allocation14], 4
      %s80 = int_to_ptr.vmem [resolvable:$true] %s79
      %85 = dma.hbm_to_vmem [thread:$0]  %s78, 1024, %s80, [#allocation13], 128, 128, 8
    $region29: #{tpu_custom_call.1} parent=1 // pred_fallthru
      _
    // Predicated region
    $region30: #{tpu_custom_call.1} parent=1 // pred_check
      _
    $region31: #{tpu_custom_call.1} parent=1 // pred_check_branch
      %87 = sbr.rel (0) target = $region33
    $region32: #{tpu_custom_call.1} parent=1 // pred_region
      _
    $region33: #{tpu_custom_call.1} parent=1 // pred_fallthru
      _
    // Predicated region
    $region34: #{tpu_custom_call.1} parent=1 // pred_check
      _
    $region35: #{tpu_custom_call.1} parent=1 // pred_check_branch
      %89 = sbr.rel (0) target = $region37
    $region36: #{tpu_custom_call.1} parent=1 // pred_region
      %91 = dma.done [#allocation7], 512
    $region37: #{tpu_custom_call.1} parent=1 // pred_fallthru
      _
    // Predicated region
    $region38: #{tpu_custom_call.1} parent=1 // pred_check
      _
    $region39: #{tpu_custom_call.1} parent=1 // pred_check_branch
      %93 = sbr.rel (0) target = $region41
    $region40: #{tpu_custom_call.1} parent=1 // pred_region
      %95 = dma.done [#allocation10], 512
    $region41: #{tpu_custom_call.1} parent=1 // pred_fallthru
      _
    // Predicated region
    $region42: #{tpu_custom_call.1} parent=1 // pred_check
      _
    $region43: #{tpu_custom_call.1} parent=1 // pred_check_branch
      %97 = sbr.rel (0) target = $region45
    $region44: #{tpu_custom_call.1} parent=1 // pred_region
      %99 = dma.done [#allocation10], 1024
    $region45: #{tpu_custom_call.1} parent=1 // pred_fallthru
      _
    // Predicated region
    $region46: #{tpu_custom_call.1} parent=1 // pred_check
      _
    $region47: #{tpu_custom_call.1} parent=1 // pred_check_branch
      %101 = sbr.rel (0) target = $region49
    $region48: #{tpu_custom_call.1} parent=1 // pred_region
      %103 = dma.done [#allocation13], 1024
    $region49: #{tpu_custom_call.1} parent=1 // pred_fallthru
      _
    // Predicated region
    $region50: #{tpu_custom_call.1} parent=1 // pred_check
      _
    $region51: #{tpu_custom_call.1} parent=1 // pred_check_branch
      %105 = sbr.rel (0) target = $region53
    $region52: #{tpu_custom_call.1} parent=1 // pred_region
      %107 = dma.done [#allocation13], 1024
    $region53: #{tpu_custom_call.1} parent=1 // pred_fallthru
      _
    %p109 = scmp.eq.s32.totalorder 0, 0
    // Predicated region
    $region54: #{tpu_custom_call.1} parent=1 // pred_check
      %p110 = pneg %p109
    $region55: #{tpu_custom_call.1} parent=1 // pred_check_branch
      %112 = sbr.rel (%p110) target = $region57
    $region56: #{tpu_custom_call.1} parent=1 // pred_region
      %v113 = vld [vmem:[#allocation6] sm:$0xff]
      %v114 = vld [vmem:[#allocation6 + $0x8] sm:$0xff]
      %v115 = vld [vmem:[#allocation6 + $0x10] sm:$0xff]
      %v116 = vld [vmem:[#allocation6 + $0x18] sm:$0xff]
      %v117 = vld [vmem:[#allocation11] sm:$0xff]
      %v118 = vld [vmem:[#allocation11 + $0x8] sm:$0xff]
      %v119 = vld [vmem:[#allocation11 + $0x10] sm:$0xff]
      %v120 = vld [vmem:[#allocation11 + $0x18] sm:$0xff]
      %v121 = vld [vmem:[#allocation11 + $0x20] sm:$0xff]
      %v122 = vld [vmem:[#allocation11 + $0x28] sm:$0xff]
      %v123 = vld [vmem:[#allocation11 + $0x30] sm:$0xff]
      %v124 = vld [vmem:[#allocation11 + $0x38] sm:$0xff]
      %v125 = vld [vmem:[%s3] sm:$0x1]
      %v127 = vperm.slane %v125, 0
      %vm129 = vcmask 523264
      %v131 = vsel %vm129, %v113, 0
      %v134 = vsel %vm129, %v114, 0
      %v137 = vsel %vm129, %v115, 0
      %v140 = vsel %vm129, %v116, 0
      %142 = vmatpush.msra.mxu0 0.0
      %143 = vmatpush.msra.mxu0 0.0
      %144 = vmatpush.msra.mxu0 0.0
      %145 = vmatpush.msra.mxu0 0.0
      %146 = vmatpush.msra.mxu0 0.0
      %147 = vmatpush.msra.mxu0 0.0
      %148 = vmatpush.msra.mxu0 0.0
      %149 = vmatpush.msra.mxu0 0.0
      %150 = vmatpush.msra.mxu0 %v124
      %151 = vmatpush.msra.mxu0 %v123
      %152 = vmatpush.msra.mxu0 %v122
      %153 = vmatpush.msra.mxu0 %v121
      %154 = vmatpush.msra.mxu0 %v120
      %155 = vmatpush.msra.mxu0 %v119
      %156 = vmatpush.msra.mxu0 %v118
      %157 = vmatpush.msra.mxu0 %v117
      %158 = vmatmul.f32.gmra.mxu0 %v131
      %v159 = vpop.f32.mrf.mxu0
      %v160 = vadd.f32 %v127, %v159
      %161 = vmatmul.f32.gmra.mxu0 %v134
      %v162 = vpop.f32.mrf.mxu0
      %v163 = vadd.f32 %v127, %v162
      %164 = vmatmul.f32.gmra.mxu0 %v137
      %v165 = vpop.f32.mrf.mxu0
      %v166 = vadd.f32 %v127, %v165
      %167 = vmatmul.f32.gmra.mxu0 %v140
      %v168 = vpop.f32.mrf.mxu0
      %v169 = vadd.f32 %v127, %v168
      %170 = vdwg.mxu0
      %v171 = vpack.c.bf16 %v160, %v160
      %v172 = vpack.c.bf16 %v163, %v163
      %v173 = vpack.c.bf16 %v166, %v166
      %v174 = vpack.c.bf16 %v169, %v169
      %vm175 = vcmask 519168
      %176 = vst.msk [vmem:[#allocation2] sm:$0xf] %vm175, %v171
      %177 = vst.msk [vmem:[#allocation2 + $0x4] sm:$0xf] %vm175, %v172
      %178 = vst.msk [vmem:[#allocation2 + $0x8] sm:$0xf] %vm175, %v173
      %179 = vst.msk [vmem:[#allocation2 + $0xc] sm:$0xf] %vm175, %v174
      %vm180 = vcmask 7168
      %181 = vst.msk [vmem:[#allocation3] sm:$0xff] %vm180, -inf
      %182 = vst.msk [vmem:[#allocation3 + $0x8] sm:$0xff] %vm180, -inf
      %183 = vst.msk [vmem:[#allocation3 + $0x10] sm:$0xff] %vm180, -inf
      %184 = vst.msk [vmem:[#allocation3 + $0x18] sm:$0xff] %vm180, -inf
      %185 = vst.msk [vmem:[#allocation4] sm:$0xff] %vm180, 0.0
      %186 = vst.msk [vmem:[#allocation4 + $0x8] sm:$0xff] %vm180, 0.0
      %187 = vst.msk [vmem:[#allocation4 + $0x10] sm:$0xff] %vm180, 0.0
      %188 = vst.msk [vmem:[#allocation4 + $0x18] sm:$0xff] %vm180, 0.0
      %189 = vst [vmem:[#allocation5] sm:$0xff] 0.0
      %190 = vst [vmem:[#allocation5 + $0x8] sm:$0xff] 0.0
      %191 = vst [vmem:[#allocation5 + $0x10] sm:$0xff] 0.0
      %192 = vst [vmem:[#allocation5 + $0x18] sm:$0xff] 0.0
    $region57: #{tpu_custom_call.1} parent=1 // pred_fallthru
      _
    %v193 = vld [vmem:[#allocation9] sm:$0xff]
    %v194 = vld [vmem:[#allocation9 + $0x8] sm:$0xff]
    %v195 = vld [vmem:[#allocation9 + $0x10] sm:$0xff]
    %v196 = vld [vmem:[#allocation9 + $0x18] sm:$0xff]
    %v197 = vld [vmem:[#allocation12] sm:$0xff]
    %v198 = vld [vmem:[#allocation12 + $0x8] sm:$0xff]
    %v199 = vld [vmem:[#allocation12 + $0x10] sm:$0xff]
    %v200 = vld [vmem:[#allocation12 + $0x18] sm:$0xff]
    %v201 = vld [vmem:[#allocation12 + $0x20] sm:$0xff]
    %v202 = vld [vmem:[#allocation12 + $0x28] sm:$0xff]
    %v203 = vld [vmem:[#allocation12 + $0x30] sm:$0xff]
    %v204 = vld [vmem:[#allocation12 + $0x38] sm:$0xff]
    %v205 = vld [vmem:[%s5] sm:$0x1]
    %v207 = vperm.slane %v205, 0
    %vm209 = vcmask 523264
    %v211 = vsel %vm209, %v193, 0
    %v214 = vsel %vm209, %v194, 0
    %v217 = vsel %vm209, %v195, 0
    %v220 = vsel %vm209, %v196, 0
    %222 = vmatpush.msra.mxu0 0.0
    %223 = vmatpush.msra.mxu0 0.0
    %224 = vmatpush.msra.mxu0 0.0
    %225 = vmatpush.msra.mxu0 0.0
    %226 = vmatpush.msra.mxu0 0.0
    %227 = vmatpush.msra.mxu0 0.0
    %228 = vmatpush.msra.mxu0 0.0
    %229 = vmatpush.msra.mxu0 0.0
    %230 = vmatpush.msra.mxu0 %v204
    %231 = vmatpush.msra.mxu0 %v203
    %232 = vmatpush.msra.mxu0 %v202
    %233 = vmatpush.msra.mxu0 %v201
    %234 = vmatpush.msra.mxu0 %v200
    %235 = vmatpush.msra.mxu0 %v199
    %236 = vmatpush.msra.mxu0 %v198
    %237 = vmatpush.msra.mxu0 %v197
    %238 = vmatmul.f32.gmra.mxu0 %v211
    %v239 = vpop.f32.mrf.mxu0
    %v240 = vadd.f32 %v207, %v239
    %241 = vmatmul.f32.gmra.mxu0 %v214
    %v242 = vpop.f32.mrf.mxu0
    %v243 = vadd.f32 %v207, %v242
    %244 = vmatmul.f32.gmra.mxu0 %v217
    %v245 = vpop.f32.mrf.mxu0
    %v246 = vadd.f32 %v207, %v245
    %247 = vmatmul.f32.gmra.mxu0 %v220
    %v248 = vpop.f32.mrf.mxu0
    %v249 = vadd.f32 %v207, %v248
    %250 = vdwg.mxu0
    %v251 = vpack.c.bf16 %v243, %v240
    %v252 = vpack.c.bf16 %v249, %v246
    %v253 = vld [vmem:[#allocation14] sm:$0xff]
    %v254 = vld [vmem:[#allocation14 + $0x8] sm:$0xff]
    %v255 = vld [vmem:[#allocation14 + $0x10] sm:$0xff]
    %v256 = vld [vmem:[#allocation14 + $0x18] sm:$0xff]
    %v257 = vld [vmem:[#allocation14 + $0x20] sm:$0xff]
    %v258 = vld [vmem:[#allocation14 + $0x28] sm:$0xff]
    %v259 = vld [vmem:[#allocation14 + $0x30] sm:$0xff]
    %v260 = vld [vmem:[#allocation14 + $0x38] sm:$0xff]
    %v261 = vpack.c.bf16 %v254, %v253
    %v262 = vpack.c.bf16 %v256, %v255
    %v263 = vpack.c.bf16 %v258, %v257
    %v264 = vpack.c.bf16 %v260, %v259
    %267 = vrot.lane.b32.xlu0 %v251, 64
    %v268 = vpop.permute.xlu0 %267
    %269 = vrot.lane.b32.xlu0 %v252, 64
    %v270 = vpop.permute.xlu0 %269
    %v272 = vsel %vm209, %v268, 0
    %v275 = vsel %vm209, %v270, 0
    %277 = vmatpush.bf16.msra.mxu0 0
    %278 = vmatpush.bf16.msra.mxu0 0
    %279 = vmatpush.bf16.msra.mxu0 0
    %280 = vmatpush.bf16.msra.mxu0 0
    %281 = vmatpush.bf16.msra.mxu0 %v264
    %282 = vmatpush.bf16.msra.mxu0 %v263
    %283 = vmatpush.bf16.msra.mxu0 %v262
    %284 = vmatpush.bf16.msra.mxu0 %v261
    %285 = vmatmul.bf16.gmra.mxu0 %v272
    %v286 = vpop.f32.mrf.mxu0
    %v287 = vadd.f32 0.0, %v286
    %v288 = vpop.f32.mrf.mxu0
    %v289 = vadd.f32 0.0, %v288
    %290 = vmatmul.bf16.gmra.mxu0 %v275
    %v291 = vpop.f32.mrf.mxu0
    %v292 = vadd.f32 0.0, %v291
    %v293 = vpop.f32.mrf.mxu0
    %v294 = vadd.f32 0.0, %v293
    %295 = vdwg.mxu0
    %v296 = vpack.c.bf16 %v289, %v287
    %v297 = vpack.c.bf16 %v294, %v292
    %v298 = vld [vmem:[#allocation2] sm:$0xf]
    %v299 = vld [vmem:[#allocation2 + $0x4] sm:$0xf]
    %v300 = vld [vmem:[#allocation2 + $0x8] sm:$0xf]
    %v301 = vld [vmem:[#allocation2 + $0xc] sm:$0xf]
    %v306 = vunpack.c.l.b16 %v298
    %v307 = vunpack.c.l.b16 %v299
    %v308 = vunpack.c.l.b16 %v300
    %v309 = vunpack.c.l.b16 %v301
    %v310 = vpack.c.b16 %v307, %v306
    %v311 = vpack.c.b16 %v309, %v308
    %v313 = vsel %vm209, %v310, 0
    %v316 = vsel %vm209, %v311, 0
    %v319 = vsel %vm209, %v251, 0
    %v322 = vsel %vm209, %v252, 0
    %324 = vmatpush.bf16.xpose.msra.mxu0 0
    %325 = vmatpush.bf16.xpose.msra.mxu0 0
    %326 = vmatpush.bf16.xpose.msra.mxu0 0
    %327 = vmatpush.bf16.xpose.msra.mxu0 0
    %328 = vmatpush.bf16.xpose.msra.mxu0 0
    %329 = vmatpush.bf16.xpose.msra.mxu0 0
    %330 = vmatpush.bf16.xpose.msra.mxu0 %v322
    %331 = vmatpush.bf16.xpose.msra.mxu0 %v319
    %332 = vmatmul.bf16.gmra.mxu0 %v313
    %v333 = vpop.f32.mrf.mxu0
    %v334 = vadd.f32 0.0, %v333
    %v335 = vpop.f32.mrf.mxu0
    %v336 = vadd.f32 0.0, %v335
    %337 = vmatmul.bf16.gmra.mxu0 %v316
    %v338 = vpop.f32.mrf.mxu0
    %v339 = vadd.f32 0.0, %v338
    %v340 = vpop.f32.mrf.mxu0
    %v341 = vadd.f32 0.0, %v340
    %342 = vdwg.mxu0
    %v343 = vld [vmem:[#allocation3] sm:$0xff]
    %v344 = vld [vmem:[#allocation3 + $0x8] sm:$0xff]
    %v345 = vld [vmem:[#allocation3 + $0x10] sm:$0xff]
    %v346 = vld [vmem:[#allocation3 + $0x18] sm:$0xff]
    %vm347 = vcmask 261120
    %v348 = vsel %vm347, %v334, -inf
    %349 = vmax.xlane.f32.xlu0 %v348
    %v350 = vpop.xlane.xlu0 %349
    %v351 = vsel %vm347, %v336, -inf
    %352 = vmax.xlane.f32.xlu0 %v351
    %v353 = vpop.xlane.xlu0 %352
    %v354 = vsel %vm347, %v339, -inf
    %355 = vmax.xlane.f32.xlu0 %v354
    %v356 = vpop.xlane.xlu0 %355
    %v357 = vsel %vm347, %v341, -inf
    %358 = vmax.xlane.f32.xlu0 %v357
    %v359 = vpop.xlane.xlu0 %358
    %v360 = vmax.f32 %v343, %v350
    %v361 = vmax.f32 %v344, %v353
    %v362 = vmax.f32 %v345, %v356
    %v363 = vmax.f32 %v346, %v359
    %v364 = vsub.f32 %v343, %v360
    %v365 = vsub.f32 %v344, %v361
    %v366 = vsub.f32 %v345, %v362
    %v367 = vsub.f32 %v346, %v363
    %v368 = vmul.f32 %v364, 1.442695
    %v369 = vpow.pop %v368
    %v370 = vmul.f32 %v365, 1.442695
    %v371 = vpow.pop %v370
    %v372 = vmul.f32 %v366, 1.442695
    %v373 = vpow.pop %v372
    %v374 = vmul.f32 %v367, 1.442695
    %v375 = vpow.pop %v374
    %377 = vset.pattern.permute.xlu0 0
    %378 = vperm.xlu0 %377, %v360
    %v379 = vpop.permute.xlu0 %378
    %382 = vset.pattern.permute.xlu0 0
    %383 = vperm.xlu0 %382, %v361
    %v384 = vpop.permute.xlu0 %383
    %387 = vset.pattern.permute.xlu0 0
    %388 = vperm.xlu0 %387, %v362
    %v389 = vpop.permute.xlu0 %388
    %392 = vset.pattern.permute.xlu0 0
    %393 = vperm.xlu0 %392, %v363
    %v394 = vpop.permute.xlu0 %393
    %v396 = vsub.f32 %v334, %v379
    %v397 = vsub.f32 %v336, %v384
    %v398 = vsub.f32 %v339, %v389
    %v399 = vsub.f32 %v341, %v394
    %v400 = vmul.f32 %v396, 1.442695
    %v401 = vpow.pop %v400
    %v402 = vmul.f32 %v397, 1.442695
    %v403 = vpow.pop %v402
    %v404 = vmul.f32 %v398, 1.442695
    %v405 = vpow.pop %v404
    %v406 = vmul.f32 %v399, 1.442695
    %v407 = vpow.pop %v406
    %v408 = vld [vmem:[#allocation4] sm:$0xff]
    %v409 = vld [vmem:[#allocation4 + $0x8] sm:$0xff]
    %v410 = vld [vmem:[#allocation4 + $0x10] sm:$0xff]
    %v411 = vld [vmem:[#allocation4 + $0x18] sm:$0xff]
    %v412 = vmul.f32 %v369, %v408
    %v413 = vmul.f32 %v371, %v409
    %v414 = vmul.f32 %v373, %v410
    %v415 = vmul.f32 %v375, %v411
    %v416 = vsel %vm347, %v401, 0.0
    %417 = vadd.xlane.f32.xlu0 %v416
    %v418 = vpop.xlane.xlu0 %417
    %v419 = vsel %vm347, %v403, 0.0
    %420 = vadd.xlane.f32.xlu0 %v419
    %v421 = vpop.xlane.xlu0 %420
    %v422 = vsel %vm347, %v405, 0.0
    %423 = vadd.xlane.f32.xlu0 %v422
    %v424 = vpop.xlane.xlu0 %423
    %v425 = vsel %vm347, %v407, 0.0
    %426 = vadd.xlane.f32.xlu0 %v425
    %v427 = vpop.xlane.xlu0 %426
    %v428 = vadd.f32 %v412, %v418
    %v429 = vadd.f32 %v413, %v421
    %v430 = vadd.f32 %v414, %v424
    %v431 = vadd.f32 %v415, %v427
    %vm432 = vcmask 7168
    %433 = vst.msk [vmem:[#allocation4] sm:$0xff] %vm432, %v428
    %434 = vst.msk [vmem:[#allocation4 + $0x8] sm:$0xff] %vm432, %v429
    %435 = vst.msk [vmem:[#allocation4 + $0x10] sm:$0xff] %vm432, %v430
    %436 = vst.msk [vmem:[#allocation4 + $0x18] sm:$0xff] %vm432, %v431
    %v437 = vld [vmem:[#allocation5] sm:$0xff]
    %v438 = vld [vmem:[#allocation5 + $0x8] sm:$0xff]
    %v439 = vld [vmem:[#allocation5 + $0x10] sm:$0xff]
    %v440 = vld [vmem:[#allocation5 + $0x18] sm:$0xff]
    %442 = vset.pattern.permute.xlu0 0
    %443 = vperm.xlu0 %442, %v369
    %v444 = vpop.permute.xlu0 %443
    %447 = vset.pattern.permute.xlu0 0
    %448 = vperm.xlu0 %447, %v371
    %v449 = vpop.permute.xlu0 %448
    %452 = vset.pattern.permute.xlu0 0
    %453 = vperm.xlu0 %452, %v373
    %v454 = vpop.permute.xlu0 %453
    %457 = vset.pattern.permute.xlu0 0
    %458 = vperm.xlu0 %457, %v375
    %v459 = vpop.permute.xlu0 %458
    %v461 = vmul.f32 %v444, %v437
    %v462 = vmul.f32 %v449, %v438
    %v463 = vmul.f32 %v454, %v439
    %v464 = vmul.f32 %v459, %v440
    %v465 = vpack.c.bf16 %v403, %v401
    %v466 = vpack.c.bf16 %v407, %v405
    %v468 = vsel %vm347, %v465, 0
    %v471 = vsel %vm347, %v466, 0
    %473 = vmatpush.bf16.msra.mxu0 0
    %474 = vmatpush.bf16.msra.mxu0 0
    %475 = vmatpush.bf16.msra.mxu0 0
    %476 = vmatpush.bf16.msra.mxu0 0
    %477 = vmatpush.bf16.msra.mxu0 0
    %478 = vmatpush.bf16.msra.mxu0 0
    %479 = vmatpush.bf16.msra.mxu0 %v297
    %480 = vmatpush.bf16.msra.mxu0 %v296
    %481 = vmatmul.bf16.gmra.mxu0 %v468
    %v482 = vpop.f32.mrf.mxu0
    %v483 = vadd.f32 0.0, %v482
    %v484 = vpop.f32.mrf.mxu0
    %v485 = vadd.f32 0.0, %v484
    %486 = vmatmul.bf16.gmra.mxu0 %v471
    %v487 = vpop.f32.mrf.mxu0
    %v488 = vadd.f32 0.0, %v487
    %v489 = vpop.f32.mrf.mxu0
    %v490 = vadd.f32 0.0, %v489
    %491 = vdwg.mxu0
    %v492 = vadd.f32 %v461, %v483
    %v493 = vadd.f32 %v462, %v485
    %v494 = vadd.f32 %v463, %v488
    %v495 = vadd.f32 %v464, %v490
    %496 = vst [vmem:[#allocation5] sm:$0xff] %v492
    %497 = vst [vmem:[#allocation5 + $0x8] sm:$0xff] %v493
    %498 = vst [vmem:[#allocation5 + $0x10] sm:$0xff] %v494
    %499 = vst [vmem:[#allocation5 + $0x18] sm:$0xff] %v495
    %500 = vst.msk [vmem:[#allocation3] sm:$0xff] %vm432, %v360
    %501 = vst.msk [vmem:[#allocation3 + $0x8] sm:$0xff] %vm432, %v361
    %502 = vst.msk [vmem:[#allocation3 + $0x10] sm:$0xff] %vm432, %v362
    %503 = vst.msk [vmem:[#allocation3 + $0x18] sm:$0xff] %vm432, %v363
    // Predicated region
    $region58: #{tpu_custom_call.1} parent=1 // pred_check
      %p504 = pneg %p109
    $region59: #{tpu_custom_call.1} parent=1 // pred_check_branch
      %506 = sbr.rel (%p504) target = $region61
    $region60: #{tpu_custom_call.1} parent=1 // pred_region
      %v507 = vld [vmem:[#allocation4] sm:$0xff]
      %v508 = vld [vmem:[#allocation4 + $0x8] sm:$0xff]
      %v509 = vld [vmem:[#allocation4 + $0x10] sm:$0xff]
      %v510 = vld [vmem:[#allocation4 + $0x18] sm:$0xff]
      %v511 = vrcp.pop %v507
      %v512 = vrcp.pop %v508
      %v513 = vrcp.pop %v509
      %v514 = vrcp.pop %v510
      %v515 = vld [vmem:[#allocation5] sm:$0xff]
      %v516 = vld [vmem:[#allocation5 + $0x8] sm:$0xff]
      %v517 = vld [vmem:[#allocation5 + $0x10] sm:$0xff]
      %v518 = vld [vmem:[#allocation5 + $0x18] sm:$0xff]
      %520 = vset.pattern.permute.xlu0 0
      %521 = vperm.xlu0 %520, %v511
      %v522 = vpop.permute.xlu0 %521
      %525 = vset.pattern.permute.xlu0 0
      %526 = vperm.xlu0 %525, %v512
      %v527 = vpop.permute.xlu0 %526
      %530 = vset.pattern.permute.xlu0 0
      %531 = vperm.xlu0 %530, %v513
      %v532 = vpop.permute.xlu0 %531
      %535 = vset.pattern.permute.xlu0 0
      %536 = vperm.xlu0 %535, %v514
      %v537 = vpop.permute.xlu0 %536
      %v539 = vmul.f32 %v515, %v522
      %v540 = vmul.f32 %v516, %v527
      %v541 = vmul.f32 %v517, %v532
      %v542 = vmul.f32 %v518, %v537
      %v543 = vld [vmem:[%s7] sm:$0x1]
      %v545 = vperm.slane %v543, 0
      %v547 = vadd.f32 %v539, %v545
      %v548 = vadd.f32 %v540, %v545
      %v549 = vadd.f32 %v541, %v545
      %v550 = vadd.f32 %v542, %v545
      %551 = vst [vmem:[#allocation15] sm:$0xff] %v547
      %552 = vst [vmem:[#allocation15 + $0x8] sm:$0xff] %v548
      %553 = vst [vmem:[#allocation15 + $0x10] sm:$0xff] %v549
      %554 = vst [vmem:[#allocation15 + $0x18] sm:$0xff] %v550
    $region61: #{tpu_custom_call.1} parent=1 // pred_fallthru
      _
    // Predicated region
    $region62: #{tpu_custom_call.1} parent=1 // pred_check
      _
    $region63: #{tpu_custom_call.1} parent=1 // pred_check_branch
      %556 = sbr.rel (0) target = $region65
    $region64: #{tpu_custom_call.1} parent=1 // pred_region
      %558 = vsyncadd [#allocation8], 0
      %s559 = sshll.u32 [#allocation15], 4
      %s560 = int_to_ptr.vmem [resolvable:$true] %s559
      %s561 = sshll.u32 %s8, 4
      %s562 = int_to_ptr.hbm [resolvable:$true] %s561
      %567 = dma.vmem_to_hbm [thread:$0]  %s560, 512, %s562, [#allocation8], 128, 128, 8
    $region65: #{tpu_custom_call.1} parent=1 // pred_fallthru
      _
    // Predicated region
    $region66: #{tpu_custom_call.1} parent=1 // pred_check
      _
    $region67: #{tpu_custom_call.1} parent=1 // pred_check_branch
      %569 = sbr.rel (0) target = $region69
    $region68: #{tpu_custom_call.1} parent=1 // pred_region
      %571 = dma.done [#allocation8], 512
    $region69: #{tpu_custom_call.1} parent=1 // pred_fallthru
      _
    %572 = vsyncpa [#allocation7], 1
    %573 = vsyncpa [#allocation10], 1
    %574 = vsyncpa [#allocation13], 1
    %575 = vsyncpa [#allocation8], 1

</llo_original>
